<compile_context>
chip_gen: v7x
topology: tpu7x:2x2x1
jax: 0.10.0
libtpu: 0.0.40
codegen_flags: <defaults>
</compile_context>

<pallas_src>
import jax
import jax.numpy as jnp
from jax import lax
from jax.experimental import pallas as pl
from jax.experimental.pallas import tpu as pltpu


def _round_up(x, m):
    return (x + m - 1) // m * m


def _device_info():
    """Return (num_tensorcores_per_device, physical_vmem_bytes) with safe fallbacks."""
    vmem = 64 * 1024 * 1024
    try:
        vmem = int(pltpu.get_tpu_info().vmem_capacity_bytes)
    except Exception:
        pass
    cores = 2  # safe fallback: the ">=2 steps" rule is merely suboptimal on 1-TC chips
    try:
        kind = jax.devices()[0].device_kind.lower()
        if any(t in kind for t in ("v5e", "v5 lite", "v5lite",
                                   "v6e", "v6 lite", "v6lite")):
            cores = 1
    except Exception:
        pass
    return cores, vmem


def _plan_batch(B, bytes_per_episode, num_cores, vmem_phys):
    """Pick episodes-per-step BB and padded batch size B_pad."""
    # Double-buffered in/out blocks must fit comfortably in VMEM.
    budget = vmem_phys // 2
    max_bb = max(1, min(8, budget // (2 * bytes_per_episode)))
    if num_cores <= 1 or B == 1:
        # Single TensorCore: fewest, fattest steps.
        bb = min(max_bb, B)
        b_pad = _round_up(B, bb)
    else:
        # Dual TensorCore: an even number of >= 2 parallel steps (balanced load).
        bb = min(max_bb, max(1, (B + 1) // 2))
        b_pad = _round_up(B, 2 * bb)
    return bb, b_pad


def _make_proto_head_kernel(block_b, use_bf16):
    mm_dtype = jnp.bfloat16 if use_bf16 else jnp.float32

    def _episode(avg, s_ref, q_ref, o_ref, b):
        s = s_ref[b]                                   # (N*K, D) f32
        q = q_ref[b]                                   # (M, D)   f32

        # Prototypes on the MXU: (N, N*K) @ (N*K, D) -> (N, D), divides by true K.
        proto = lax.dot_general(
            avg.astype(mm_dtype), s.astype(mm_dtype),
            (((1,), (0,)), ((), ())),
            preferred_element_type=jnp.float32)

        # Cross term: contract the feature dim of both operands (no transpose).
        qp = lax.dot_general(
            q.astype(mm_dtype), proto.astype(mm_dtype),
            (((1,), (1,)), ((), ())),
            preferred_element_type=jnp.float32)        # (M, N)

        q_sq = jnp.sum(q * q, axis=-1, keepdims=True)          # (M, 1)
        p_sq = jnp.sum(proto * proto, axis=-1)[None, :]        # (1, N)

        # -||q - p||^2 = 2 q.p - ||q||^2 - ||p||^2
        o_ref[b] = 2.0 * qp - q_sq - p_sq

    def kernel(avg_ref, s_ref, q_ref, o_ref):
        avg = avg_ref[...]                             # (N, N*K), VMEM-resident constant
        if block_b <= 2:
            # Short static unroll: full LLO scheduling visibility, small live set.
            for b in range(block_b):
                _episode(avg, s_ref, q_ref, o_ref, b)
        else:
            # Bound live ranges for fatter blocks.
            def body(b, carry):
                _episode(avg, s_ref, q_ref, o_ref, b)
                return carry
            lax.fori_loop(0, block_b, body, 0)

    return kernel


def proto_head(support, query):
    """support: (B,N,K,D), query: (B,N,Q,D) -> logits (B, N*Q, N) f32."""
    B, N, K, D = support.shape
    Q = query.shape[2]
    M = N * Q
    NK = N * K

    num_cores, vmem_phys = _device_info()
    bytes_per_episode = 4 * (NK * D + M * D + M * N)   # f32 blocks (s, q, out)
    bb, b_pad = _plan_batch(B, bytes_per_episode, num_cores, vmem_phys)

    s_flat = support.reshape(B, NK, D).astype(jnp.float32)   # glue reshapes in plain JAX
    q_flat = query.reshape(B, M, D).astype(jnp.float32)
    if b_pad != B:
        pad = [(0, b_pad - B), (0, 0), (0, 0)]
        s_flat = jnp.pad(s_flat, pad)
        q_flat = jnp.pad(q_flat, pad)

    # Shot-averaging matrix (N, N*K): row n has 1/K in columns [n*K, (n+1)*K).
    # Built once in the wrapper; stays VMEM-resident via a constant index_map.
    avg = ((jnp.arange(NK, dtype=jnp.int32)[None, :] // K
            == jnp.arange(N, dtype=jnp.int32)[:, None]).astype(jnp.float32) / float(K))

    use_bf16 = D >= 256
    kernel = _make_proto_head_kernel(bb, use_bf16)

    # Scoped-VMEM limit: cover the double-buffered blocks with headroom, never more
    # than ~3/4 of physical VMEM (important on the 64 MiB v7x part).
    vmem_limit = int(min(0.75 * vmem_phys,
                         max(32 << 20, 4 * bb * bytes_per_episode + (4 << 20))))

    out = pl.pallas_call(
        kernel,
        out_shape=jax.ShapeDtypeStruct((b_pad, M, N), jnp.float32),
        grid_spec=pltpu.PrefetchScalarGridSpec(
            num_scalar_prefetch=0,
            grid=(b_pad // bb,),
            in_specs=[
                pl.BlockSpec((N, NK), lambda i: (0, 0)),          # avg (resident)
                pl.BlockSpec((bb, NK, D), lambda i: (i, 0, 0)),   # support slab
                pl.BlockSpec((bb, M, D), lambda i: (i, 0, 0)),    # query slab
            ],
            out_specs=pl.BlockSpec((bb, M, N), lambda i: (i, 0, 0)),
        ),
        compiler_params=pltpu.CompilerParams(
            dimension_semantics=("parallel",),
            vmem_limit_bytes=vmem_limit),
    )(avg, s_flat, q_flat)

    return out[:B] if b_pad != B else out


def proto_head_ref(support, query):
    """Pure-JAX reference matching the PyTorch forward exactly."""
    B, N, K, D = support.shape
    Q = query.shape[2]
    prototypes = jnp.mean(support, axis=2)                      # (B, N, D)
    q = query.reshape(B, N * Q, D)[:, :, None, :]               # (B, M, 1, D)
    p = prototypes[:, None, :, :]                               # (B, 1, N, D)
    err = q - p                                                 # (B, M, N, D)
    return -jnp.sum(err * err, axis=3)                          # (B, M, N)


if __name__ == "__main__":
    # Small shapes consistent with a few-shot episode: B=2 episodes,
    # N=4 ways, K=4 shots, Q=8 queries per class, D=32 features.
    B, N, K, Q, D = 2, 4, 4, 8, 32
    key = jax.random.PRNGKey(0)
    k_s, k_q = jax.random.split(key)
    support = jax.random.normal(k_s, (B, N, K, D), dtype=jnp.float32)
    query = jax.random.normal(k_q, (B, N, Q, D), dtype=jnp.float32)

    logits = jax.block_until_ready(proto_head(support, query))
    expected = proto_head_ref(support, query)

    assert logits.shape == (B, N * Q, N), logits.shape
    assert jnp.allclose(logits, expected, atol=1e-3, rtol=1e-3), (
        float(jnp.max(jnp.abs(logits - expected))))
    print("KERNEL_OK")
</pallas_src>

<mosaic_0001>
module attributes {stable_mosaic.version = 11 : i64} {
  func.func @kernel(%arg0: i32, %arg1: memref<4x16xf32, #tpu.memory_space<vmem>>, %arg2: memref<1x16x32xf32, #tpu.memory_space<vmem>>, %arg3: memref<1x32x32xf32, #tpu.memory_space<vmem>>, %arg4: memref<1x32x4xf32, #tpu.memory_space<vmem>>) attributes {dimension_semantics = [#tpu.dimension_semantics<parallel>], iteration_bounds = array<i64: 2>, scalar_prefetch = 0 : i64, scratch_operands = 0 : i64, tpu.core_type = #tpu.core_type<tc>, window_params = [{pipeline_mode = #tpu.pipeline_mode<synchronous>, transform_indices = @transform_0, window_bounds = array<i64: 4, 16>}, {transform_indices = @transform_1, window_bounds = array<i64: 1, 16, 32>}, {transform_indices = @transform_2, window_bounds = array<i64: 1, 32, 32>}, {transform_indices = @transform_3, window_bounds = array<i64: 1, 32, 4>}]} {
    %c0 = arith.constant 0 : index
    %c0_0 = arith.constant 0 : index
    %0 = vector.load %arg1[%c0, %c0_0] : memref<4x16xf32, #tpu.memory_space<vmem>>, vector<4x16xf32>
    %c0_1 = arith.constant 0 : index
    %c0_2 = arith.constant 0 : index
    %c0_3 = arith.constant 0 : index
    %1 = vector.load %arg2[%c0_1, %c0_2, %c0_3] : memref<1x16x32xf32, #tpu.memory_space<vmem>>, vector<1x16x32xf32>
    %2 = vector.shape_cast %1 : vector<1x16x32xf32> to vector<16x32xf32>
    %c0_4 = arith.constant 0 : index
    %c0_5 = arith.constant 0 : index
    %c0_6 = arith.constant 0 : index
    %3 = vector.load %arg3[%c0_4, %c0_5, %c0_6] : memref<1x32x32xf32, #tpu.memory_space<vmem>>, vector<1x32x32xf32>
    %4 = vector.shape_cast %3 : vector<1x32x32xf32> to vector<32x32xf32>
    %cst = arith.constant dense<0.000000e+00> : vector<4x32xf32>
    %5 = tpu.matmul %0, %2, %cst {dimension_numbers = #tpu.dot_dimension_numbers<[1], [0], [0], [1], [0, 0, 1, 1], [], []>} : vector<4x16xf32>, vector<16x32xf32>, vector<4x32xf32> -> vector<4x32xf32>
    %cst_7 = arith.constant dense<0.000000e+00> : vector<32x4xf32>
    %6 = tpu.matmul %4, %5, %cst_7 {dimension_numbers = #tpu.dot_dimension_numbers<[1], [1], [0], [0], [0, 0, 1, 0], [], []>} : vector<32x32xf32>, vector<4x32xf32>, vector<32x4xf32> -> vector<32x4xf32>
    %7 = arith.mulf %4, %4 : vector<32x32xf32>
    %cst_8 = arith.constant dense<0.000000e+00> : vector<32xf32>
    %8 = vector.multi_reduction <add>, %7, %cst_8 [1] : vector<32x32xf32> to vector<32xf32>
    %9 = vector.shape_cast %8 : vector<32xf32> to vector<32x1xf32>
    %10 = arith.mulf %5, %5 : vector<4x32xf32>
    %cst_9 = arith.constant dense<0.000000e+00> : vector<4xf32>
    %11 = vector.multi_reduction <add>, %10, %cst_9 [1] : vector<4x32xf32> to vector<4xf32>
    %12 = vector.shape_cast %11 : vector<4xf32> to vector<1x4xf32>
    %cst_10 = arith.constant 2.000000e+00 : f32
    %13 = vector.broadcast %cst_10 : f32 to vector<32x4xf32>
    %14 = arith.mulf %13, %6 : vector<32x4xf32>
    %15 = vector.broadcast %9 : vector<32x1xf32> to vector<32x4xf32>
    %16 = arith.subf %14, %15 : vector<32x4xf32>
    %17 = vector.broadcast %12 : vector<1x4xf32> to vector<32x4xf32>
    %18 = arith.subf %16, %17 : vector<32x4xf32>
    %c0_11 = arith.constant 0 : index
    %c0_12 = arith.constant 0 : index
    %c0_13 = arith.constant 0 : index
    %19 = vector.load %arg4[%c0_11, %c0_12, %c0_13] : memref<1x32x4xf32, #tpu.memory_space<vmem>>, vector<1x32x4xf32>
    %20 = vector.shape_cast %19 : vector<1x32x4xf32> to vector<32x4xf32>
    %21 = vector.shape_cast %18 : vector<32x4xf32> to vector<1x32x4xf32>
    tpu.vector_store %arg4[%c0_11, %c0_12, %c0_13], %21 {strides = array<i32>} : memref<1x32x4xf32, #tpu.memory_space<vmem>>, vector<1x32x4xf32>,
    return
  }
  func.func @transform_0(%arg0: i32) -> (i32, i32) {
    %c0_i32 = arith.constant 0 : i32
    %c0_i32_0 = arith.constant 0 : i32
    %c0_i32_1 = arith.constant 0 : i32
    return %c0_i32, %c0_i32_0 : i32, i32
  }
  func.func @transform_1(%arg0: i32) -> (i32, i32, i32) {
    %c0_i32 = arith.constant 0 : i32
    %c0_i32_0 = arith.constant 0 : i32
    %c0_i32_1 = arith.constant 0 : i32
    return %arg0, %c0_i32, %c0_i32_0 : i32, i32, i32
  }
  func.func @transform_2(%arg0: i32) -> (i32, i32, i32) {
    %c0_i32 = arith.constant 0 : i32
    %c0_i32_0 = arith.constant 0 : i32
    %c0_i32_1 = arith.constant 0 : i32
    return %arg0, %c0_i32, %c0_i32_0 : i32, i32, i32
  }
  func.func @transform_3(%arg0: i32) -> (i32, i32, i32) {
    %c0_i32 = arith.constant 0 : i32
    %c0_i32_0 = arith.constant 0 : i32
    %c0_i32_1 = arith.constant 0 : i32
    return %arg0, %c0_i32, %c0_i32_0 : i32, i32, i32
  }
}

</mosaic_0001>

<llo_original>
// kernel: tpu_custom_call.1
$region0: #{tpu_custom_call.1}
  #allocation0 [shape = 'u32[]', space=smem, size = 0x4, offset = 0x4, fixed_abs, tag = 'smem constant byte address 0x4 - core index']
  #allocation1 [shape = 'u32[144,128]{1,0:T(1,128)}', space=vmem, size = 0x12000, scoped, tag = 'internal scratch']
  %s0 = inlined_call_operand.hbm [shape: f32[4,16], index: 0, kind: input, shape index: {}]
  %s1 = inlined_call_operand.hbm [shape: f32[2,16,32], index: 1, kind: input, shape index: {}]
  %s2 = inlined_call_operand.hbm [shape: f32[2,32,32], index: 2, kind: input, shape index: {}]
  %s3 = inlined_call_operand.vmem [shape: f32[2,32,4], index: 3, kind: output, shape index: {}]
  %s4 = sld [smem:[#allocation0]]
  $region57: #{tpu_custom_call.1} parent=0
    _
  %s6 = ssub.s32 1, %s4
  %s7 = scalar_select 0, %s6, %s4
  $region1: #{tpu_custom_call.1} parent=0
    #allocation2 [shape = 'u8[2048]{0}', space=vmem, size = 0x800, scoped, tag = 'input window, operand 0, single buffered']
    #allocation3 [shape = 's32[2]{0}', space=sflag, size = 0x8, scoped, tag = 'scoped memory for tpu_custom_call.1']
    #allocation4 [shape = 'u8[16384]{0}', space=vmem, size = 0x4000, scoped, tag = 'input window, operand 1']
    #allocation5 [shape = 's32[2]{0}', space=sflag, size = 0x8, scoped, tag = 'scoped memory for tpu_custom_call.1']
    #allocation6 [shape = 'u8[32768]{0}', space=vmem, size = 0x8000, scoped, tag = 'input window, operand 2']
    %8 = vsyncpa [#allocation3], 0
    %9 = vsyncpa [#allocation5], 0
    %s10 = scalar_lea.sflag [#allocation5], 1
    %11 = vsyncpa %s10, 0
    loop: start=0, step=1, limit=4
    $region2: #{tpu_custom_call.1} parent=1 // loop_pre_header
      _
    $region3: #{tpu_custom_call.1} parent=1 // loop_header
      %s13 = sphi 0, %s17
      %p14 = scmp.ge.s32.totalorder %s13, 4
      %s21 = sphi 0, %s21
      %s23 = sphi 0, %s21
      %s24 = sphi 0, %s23
      %s38 = sphi 0, %s24
      %s44 = sphi 0, %s46
      %s47 = sphi 0, %s44
      %s48 = sphi 0, %s47
      %s64 = sphi 0, %s48
      %s70 = sphi 0, %s72
      %s73 = sphi 0, %s70
      %s74 = sphi 0, %s73
      %s90 = sphi 0, %s74
      %s96 = sphi 0, %s98
      %s99 = sphi 0, %s96
      %s100 = sphi 0, %s99
      %s116 = sphi 0, %s100
    $region4: #{tpu_custom_call.1} parent=1 // loop_header_branch
      %16 = sbr.rel (%p14) target = $region8
    $region5: #{tpu_custom_call.1} parent=1 // loop_body
      %s18 = ssub.s32 %s13, 1
      %s19 = ssub.s32 %s13, 2
      %s20 = sadd.s32 %s13, 1
      %s22 = sadd.s32 %s21, 1
      %p25 = scmp.eq.s32.totalorder %s13, 1
      %p26 = scmp.ne.s32.totalorder %s21, %s23
      %p27 = scmp.eq.s32.totalorder %s13, 0
      %p28 = por %p26, %p27
      %p29 = scmp.ne.s32.totalorder %s21, %s23
      %p30 = scmp.eq.s32.totalorder %s18, 1
      %p31 = por %p29, %p30
      %p32 = scmp.ne.s32.totalorder %s23, %s24
      %p33 = scmp.eq.s32.totalorder %s18, 0
      %p34 = por %p32, %p33
      %p35 = scmp.ne.s32.totalorder %s23, %s24
      %p36 = scmp.eq.s32.totalorder %s19, 1
      %p37 = por %p35, %p36
      %p39 = scmp.ne.s32.totalorder %s24, %s38
      %p40 = scmp.eq.s32.totalorder %s19, 0
      %p41 = por %p39, %p40
      %s42 = ssub.s32 %s13, %s20
      %p43 = scmp.eq.s32.totalorder %s42, 0
      %s45 = sadd.s32 %s44, 1
      %s46 = scalar_select %p43, %s44, %s45
      %p49 = pneg %p43
      %p50 = scmp.eq.s32.totalorder %s13, 1
      %p51 = por %p49, %p50
      %p52 = scmp.ne.s32.totalorder %s44, %s47
      %p53 = scmp.eq.s32.totalorder %s13, 0
      %p54 = por %p52, %p53
      %p55 = scmp.ne.s32.totalorder %s44, %s47
      %p56 = scmp.eq.s32.totalorder %s18, 1
      %p57 = por %p55, %p56
      %p58 = scmp.ne.s32.totalorder %s47, %s48
      %p59 = scmp.eq.s32.totalorder %s18, 0
      %p60 = por %p58, %p59
      %p61 = scmp.ne.s32.totalorder %s47, %s48
      %p62 = scmp.eq.s32.totalorder %s19, 1
      %p63 = por %p61, %p62
      %p65 = scmp.ne.s32.totalorder %s48, %s64
      %p66 = scmp.eq.s32.totalorder %s19, 0
      %p67 = por %p65, %p66
      %s68 = ssub.s32 %s13, %s20
      %p69 = scmp.eq.s32.totalorder %s68, 0
      %s71 = sadd.s32 %s70, 1
      %s72 = scalar_select %p69, %s70, %s71
      %p75 = pneg %p69
      %p76 = scmp.eq.s32.totalorder %s13, 1
      %p77 = por %p75, %p76
      %p78 = scmp.ne.s32.totalorder %s70, %s73
      %p79 = scmp.eq.s32.totalorder %s13, 0
      %p80 = por %p78, %p79
      %p81 = scmp.ne.s32.totalorder %s70, %s73
      %p82 = scmp.eq.s32.totalorder %s18, 1
      %p83 = por %p81, %p82
      %p84 = scmp.ne.s32.totalorder %s73, %s74
      %p85 = scmp.eq.s32.totalorder %s18, 0
      %p86 = por %p84, %p85
      %p87 = scmp.ne.s32.totalorder %s73, %s74
      %p88 = scmp.eq.s32.totalorder %s19, 1
      %p89 = por %p87, %p88
      %p91 = scmp.ne.s32.totalorder %s74, %s90
      %p92 = scmp.eq.s32.totalorder %s19, 0
      %p93 = por %p91, %p92
      %s94 = ssub.s32 %s13, %s20
      %p95 = scmp.eq.s32.totalorder %s94, 0
      %s97 = sadd.s32 %s96, 1
      %s98 = scalar_select %p95, %s96, %s97
      %p101 = pneg %p95
      %p102 = scmp.eq.s32.totalorder %s13, 1
      %p103 = por %p101, %p102
      %p104 = scmp.ne.s32.totalorder %s96, %s99
      %p105 = scmp.eq.s32.totalorder %s13, 0
      %p106 = por %p104, %p105
      %p107 = scmp.ne.s32.totalorder %s96, %s99
      %p108 = scmp.eq.s32.totalorder %s18, 1
      %p109 = por %p107, %p108
      %p110 = scmp.ne.s32.totalorder %s99, %s100
      %p111 = scmp.eq.s32.totalorder %s18, 0
      %p112 = por %p110, %p111
      %p113 = scmp.ne.s32.totalorder %s99, %s100
      %p114 = scmp.eq.s32.totalorder %s19, 1
      %p115 = por %p113, %p114
      %p117 = scmp.ne.s32.totalorder %s100, %s116
      %p118 = scmp.eq.s32.totalorder %s19, 0
      %p119 = por %p117, %p118
      %p120 = scmp.le.s32.totalorder 1, %s13
      %p121 = scmp.lt.s32.totalorder %s13, 3
      %p122 = pnand %p120, %p121
      %p123 = pneg %p122
      // Predicated region
      $region9: #{tpu_custom_call.1} parent=5 // pred_check
        _
      $region10: #{tpu_custom_call.1} parent=5 // pred_check_branch
        %125 = sbr.rel (%p122) target = $region12
      $region11: #{tpu_custom_call.1} parent=5 // pred_region
        %s126 = ssub.s32 %s13, 1
        // Predicated region
        $region13: #{tpu_custom_call.1} parent=11 // pred_check
          %p127 = pneg %p34
        $region14: #{tpu_custom_call.1} parent=11 // pred_check_branch
          %129 = sbr.rel (%p127) target = $region16
        $region15: #{tpu_custom_call.1} parent=11 // pred_region
          %s131 = ssub.s32 64, 64
          %132 = vsyncadd [#allocation3], %s131
          %s134 = sshll.u32 [#allocation2], 4
          %s135 = int_to_ptr.vmem [resolvable:$true] %s134
          %137 = dma.hbm_to_vmem [thread:$0]  %s0, 64, %s135, [#allocation3]
        $region16: #{tpu_custom_call.1} parent=11 // pred_fallthru
          _
      $region12: #{tpu_custom_call.1} parent=5 // pred_fallthru
        _
      %p138 = scmp.lt.s32.totalorder %s13, 2
      // Predicated region
      $region17: #{tpu_custom_call.1} parent=5 // pred_check
        %p139 = pneg %p138
      $region18: #{tpu_custom_call.1} parent=5 // pred_check_branch
        %141 = sbr.rel (%p139) target = $region20
      $region19: #{tpu_custom_call.1} parent=5 // pred_region
        // Predicated region
        $region21: #{tpu_custom_call.1} parent=19 // pred_check
          %p142 = pneg %p54
        $region22: #{tpu_custom_call.1} parent=19 // pred_check_branch
          %144 = sbr.rel (%p142) target = $region24
        $region23: #{tpu_custom_call.1} parent=19 // pred_region
          %s145 = sand.u32 %s13, 1
          %s146 = scalar_lea.sflag [#allocation5], %s145
          %s147 = sand.u32 %s44, 1
          %s148 = smul.addr %s147, 16
          %s149 = scalar_lea.vmem [#allocation4], %s148
          %s151 = ssub.s32 256, 256
          %152 = vsyncadd %s146, %s151
          %s153 = smul.addr %s13, 2
          %s154 = smul.addr %s153, 128
          %s155 = scalar_lea.hbm %s1, %s154
          %s156 = sshll.u32 %s149, 4
          %s157 = int_to_ptr.vmem [resolvable:$true] %s156
          %162 = dma.hbm_to_vmem [thread:$0]  %s155, 256, %s157, %s146, 128, 128, 8
        $region24: #{tpu_custom_call.1} parent=19 // pred_fallthru
          _
        // Predicated region
        $region25: #{tpu_custom_call.1} parent=19 // pred_check
          %p163 = pneg %p80
        $region26: #{tpu_custom_call.1} parent=19 // pred_check_branch
          %165 = sbr.rel (%p163) target = $region28
        $region27: #{tpu_custom_call.1} parent=19 // pred_region
          %s166 = sand.u32 %s13, 1
          %s167 = scalar_lea.sflag [#allocation5], %s166
          %s168 = sand.u32 %s70, 1
          %s169 = smul.addr %s168, 32
          %s170 = scalar_lea.vmem [#allocation6], %s169
          %s172 = ssub.s32 512, 512
          %173 = vsyncadd %s167, %s172
          %s174 = smul.addr %s13, 4
          %s175 = smul.addr %s174, 128
          %s176 = scalar_lea.hbm %s2, %s175
          %s177 = sshll.u32 %s170, 4
          %s178 = int_to_ptr.vmem [resolvable:$true] %s177
          %183 = dma.hbm_to_vmem [thread:$0]  %s176, 512, %s178, %s167, 128, 128, 8
        $region28: #{tpu_custom_call.1} parent=19 // pred_fallthru
          _
      $region20: #{tpu_custom_call.1} parent=5 // pred_fallthru
        _
      %p184 = scmp.le.s32.totalorder 1, %s13
      %p185 = scmp.lt.s32.totalorder %s13, 3
      %p186 = pnand %p184, %p185
      %p187 = pneg %p186
      // Predicated region
      $region29: #{tpu_custom_call.1} parent=5 // pred_check
        _
      $region30: #{tpu_custom_call.1} parent=5 // pred_check_branch
        %189 = sbr.rel (%p186) target = $region32
      $region31: #{tpu_custom_call.1} parent=5 // pred_region
        %s190 = ssub.s32 %s13, 1
        // Predicated region
        $region33: #{tpu_custom_call.1} parent=31 // pred_check
          %p191 = pneg %p34
        $region34: #{tpu_custom_call.1} parent=31 // pred_check_branch
          %193 = sbr.rel (%p191) target = $region36
        $region35: #{tpu_custom_call.1} parent=31 // pred_region
          %194 = dma.done [#allocation3], 64
        $region36: #{tpu_custom_call.1} parent=31 // pred_fallthru
          _
        %s195 = sand.u32 %s18, 1
        %s196 = scalar_lea.sflag [#allocation5], %s195
        %s197 = sand.u32 %s47, 1
        %s198 = smul.addr %s197, 16
        %s199 = scalar_lea.vmem [#allocation4], %s198
        // Predicated region
        $region37: #{tpu_custom_call.1} parent=31 // pred_check
          %p200 = pneg %p60
        $region38: #{tpu_custom_call.1} parent=31 // pred_check_branch
          %202 = sbr.rel (%p200) target = $region40
        $region39: #{tpu_custom_call.1} parent=31 // pred_region
          %203 = dma.done %s196, 256
        $region40: #{tpu_custom_call.1} parent=31 // pred_fallthru
          _
        %s204 = sand.u32 %s18, 1
        %s205 = scalar_lea.sflag [#allocation5], %s204
        %s206 = sand.u32 %s73, 1
        %s207 = smul.addr %s206, 32
        %s208 = scalar_lea.vmem [#allocation6], %s207
        // Predicated region
        $region41: #{tpu_custom_call.1} parent=31 // pred_check
          %p209 = pneg %p86
        $region42: #{tpu_custom_call.1} parent=31 // pred_check_branch
          %211 = sbr.rel (%p209) target = $region44
        $region43: #{tpu_custom_call.1} parent=31 // pred_region
          %212 = dma.done %s205, 512
        $region44: #{tpu_custom_call.1} parent=31 // pred_fallthru
          _
        %p213 = pneg %p34
        %p214 = pneg %p31
        %s215 = sand.u32 %s18, 1
        %s216 = scalar_lea.sflag [#allocation5], %s215
        %s217 = sand.u32 %s47, 1
        %s218 = smul.addr %s217, 16
        %s219 = scalar_lea.vmem [#allocation4], %s218
        %p220 = pneg %p60
        %p221 = pneg %p57
        %s222 = sand.u32 %s18, 1
        %s223 = scalar_lea.sflag [#allocation5], %s222
        %s224 = sand.u32 %s73, 1
        %s225 = smul.addr %s224, 32
        %s226 = scalar_lea.vmem [#allocation6], %s225
        %p227 = pneg %p86
        %p228 = pneg %p83
        %p229 = pneg %p112
        %p230 = pneg %p109
        %p231 = scmp.lt.s32.totalorder %s18, 1
        %s232 = scalar_select %p231, %s18, 1
        %s233 = smul.addr %s232, 4
        %s234 = smul.addr %s233, 8
        %s235 = scalar_lea.vmem %s3, %s234
        %p236 = scmp.lt.s32.totalorder %s18, 1
        %s237 = scalar_select %p236, %s18, 1
        %s238 = smul.addr %s237, 4
        %s239 = smul.addr %s238, 8
        %s240 = scalar_lea.vmem %s3, %s239
        %v241 = vld [vmem:[#allocation2] sm:$0xf]
        %v242 = vld [vmem:[%s199] sm:$0xff]
        %v243 = vld [vmem:[%s199 + $0x8] sm:$0xff]
        %v244 = vld [vmem:[%s208] sm:$0xff]
        %v245 = vld [vmem:[%s208 + $0x8] sm:$0xff]
        %v246 = vld [vmem:[%s208 + $0x10] sm:$0xff]
        %v247 = vld [vmem:[%s208 + $0x18] sm:$0xff]
        %vm248 = vcmask 130048
        %v250 = vsel %vm248, %v241, 0
        %252 = vmatprep.subr.mxu0 0.0
        %253 = vmatpush1.msra.mxu0 %v242
        %254 = vmatprep.subr.mxu0 0.0
        %255 = vmatpush1.msra.mxu0 %v243
        %256 = vmatprep.subr.mxu0 0.0
        %257 = vmatpush1.msra.mxu0 0.0
        %258 = vmatprep.subr.mxu0 0.0
        %259 = vmatpush1.msra.mxu0 0.0
        %260 = vmatprep.subr.mxu0 0.0
        %261 = vmatpush1.msra.mxu0 0.0
        %262 = vmatprep.subr.mxu0 0.0
        %263 = vmatpush1.msra.mxu0 0.0
        %264 = vmatprep.subr.mxu0 0.0
        %265 = vmatpush1.msra.mxu0 0.0
        %266 = vmatprep.subr.mxu0 0.0
        %267 = vmatpush1.msra.mxu0 0.0
        %268 = vmatprep.subr.mxu0 0.0
        %269 = vmatpush1.msra.mxu0 0.0
        %270 = vmatprep.subr.mxu0 0.0
        %271 = vmatpush1.msra.mxu0 0.0
        %272 = vmatprep.subr.mxu0 0.0
        %273 = vmatpush1.msra.mxu0 0.0
        %274 = vmatprep.subr.mxu0 0.0
        %275 = vmatpush1.msra.mxu0 0.0
        %276 = vmatprep.subr.mxu0 0.0
        %277 = vmatpush1.msra.mxu0 0.0
        %278 = vmatprep.subr.mxu0 0.0
        %279 = vmatpush1.msra.mxu0 0.0
        %280 = vmatprep.subr.mxu0 0.0
        %281 = vmatpush1.msra.mxu0 0.0
        %282 = vmatprep.subr.mxu0 0.0
        %283 = vmatpush1.msra.mxu0 0.0
        %284 = vmatprep.subr.mxu0 0.0
        %285 = vmatpush1.msra.mxu0 0.0
        %286 = vmatprep.subr.mxu0 0.0
        %287 = vmatpush1.msra.mxu0 0.0
        %288 = vmatprep.subr.mxu0 0.0
        %289 = vmatpush1.msra.mxu0 0.0
        %290 = vmatprep.subr.mxu0 0.0
        %291 = vmatpush1.msra.mxu0 0.0
        %292 = vmatprep.subr.mxu0 0.0
        %293 = vmatpush1.msra.mxu0 0.0
        %294 = vmatprep.subr.mxu0 0.0
        %295 = vmatpush1.msra.mxu0 0.0
        %296 = vmatprep.subr.mxu0 0.0
        %297 = vmatpush1.msra.mxu0 0.0
        %298 = vmatprep.subr.mxu0 0.0
        %299 = vmatpush1.msra.mxu0 0.0
        %300 = vmatprep.subr.mxu0 0.0
        %301 = vmatpush1.msra.mxu0 0.0
        %302 = vmatprep.subr.mxu0 0.0
        %303 = vmatpush1.msra.mxu0 0.0
        %304 = vmatprep.subr.mxu0 0.0
        %305 = vmatpush1.msra.mxu0 0.0
        %306 = vmatprep.subr.mxu0 0.0
        %307 = vmatpush1.msra.mxu0 0.0
        %308 = vmatprep.subr.mxu0 0.0
        %309 = vmatpush1.msra.mxu0 0.0
        %310 = vmatprep.subr.mxu0 0.0
        %311 = vmatpush1.msra.mxu0 0.0
        %312 = vmatprep.subr.mxu0 0.0
        %313 = vmatpush1.msra.mxu0 0.0
        %314 = vmatprep.subr.mxu0 0.0
        %315 = vmatpush1.msra.mxu0 0.0
        %316 = vmatprep.mubr.f32.mxu0 0.0
        %317 = vmatmul.mubr.f32.gmra.mrb[0].mxu0 %v250
        %v318 = vpop.f32.mrb[0].mxu0
        %v319 = vadd.f32 0.0, %v318
        %v320 = vpop.f32.mrb[0].mxu0
        %321 = vdwg.mxu0
        %vm322 = vcmask 261120
        %v324 = vsel %vm322, %v244, 0
        %v327 = vsel %vm322, %v245, 0
        %v330 = vsel %vm322, %v246, 0
        %v333 = vsel %vm322, %v247, 0
        %v336 = vsel %vm322, %v319, 0
        %338 = vmatprep.subr.mxu0 0.0
        %339 = vmatpush1.xpose.msra.mxu0 %v336
        %340 = vmatprep.subr.mxu0 0.0
        %341 = vmatpush1.xpose.msra.mxu0 0.0
        %342 = vmatprep.subr.mxu0 0.0
        %343 = vmatpush1.xpose.msra.mxu0 0.0
        %344 = vmatprep.subr.mxu0 0.0
        %345 = vmatpush1.xpose.msra.mxu0 0.0
        %346 = vmatprep.subr.mxu0 0.0
        %347 = vmatpush1.xpose.msra.mxu0 0.0
        %348 = vmatprep.subr.mxu0 0.0
        %349 = vmatpush1.xpose.msra.mxu0 0.0
        %350 = vmatprep.subr.mxu0 0.0
        %351 = vmatpush1.xpose.msra.mxu0 0.0
        %352 = vmatprep.subr.mxu0 0.0
        %353 = vmatpush1.xpose.msra.mxu0 0.0
        %354 = vmatprep.subr.mxu0 0.0
        %355 = vmatpush1.xpose.msra.mxu0 0.0
        %356 = vmatprep.subr.mxu0 0.0
        %357 = vmatpush1.xpose.msra.mxu0 0.0
        %358 = vmatprep.subr.mxu0 0.0
        %359 = vmatpush1.xpose.msra.mxu0 0.0
        %360 = vmatprep.subr.mxu0 0.0
        %361 = vmatpush1.xpose.msra.mxu0 0.0
        %362 = vmatprep.subr.mxu0 0.0
        %363 = vmatpush1.xpose.msra.mxu0 0.0
        %364 = vmatprep.subr.mxu0 0.0
        %365 = vmatpush1.xpose.msra.mxu0 0.0
        %366 = vmatprep.subr.mxu0 0.0
        %367 = vmatpush1.xpose.msra.mxu0 0.0
        %368 = vmatprep.subr.mxu0 0.0
        %369 = vmatpush1.xpose.msra.mxu0 0.0
        %370 = vmatprep.subr.mxu0 0.0
        %371 = vmatpush1.xpose.msra.mxu0 0.0
        %372 = vmatprep.subr.mxu0 0.0
        %373 = vmatpush1.xpose.msra.mxu0 0.0
        %374 = vmatprep.subr.mxu0 0.0
        %375 = vmatpush1.xpose.msra.mxu0 0.0
        %376 = vmatprep.subr.mxu0 0.0
        %377 = vmatpush1.xpose.msra.mxu0 0.0
        %378 = vmatprep.subr.mxu0 0.0
        %379 = vmatpush1.xpose.msra.mxu0 0.0
        %380 = vmatprep.subr.mxu0 0.0
        %381 = vmatpush1.xpose.msra.mxu0 0.0
        %382 = vmatprep.subr.mxu0 0.0
        %383 = vmatpush1.xpose.msra.mxu0 0.0
        %384 = vmatprep.subr.mxu0 0.0
        %385 = vmatpush1.xpose.msra.mxu0 0.0
        %386 = vmatprep.subr.mxu0 0.0
        %387 = vmatpush1.xpose.msra.mxu0 0.0
        %388 = vmatprep.subr.mxu0 0.0
        %389 = vmatpush1.xpose.msra.mxu0 0.0
        %390 = vmatprep.subr.mxu0 0.0
        %391 = vmatpush1.xpose.msra.mxu0 0.0
        %392 = vmatprep.subr.mxu0 0.0
        %393 = vmatpush1.xpose.msra.mxu0 0.0
        %394 = vmatprep.subr.mxu0 0.0
        %395 = vmatpush1.xpose.msra.mxu0 0.0
        %396 = vmatprep.subr.mxu0 0.0
        %397 = vmatpush1.xpose.msra.mxu0 0.0
        %398 = vmatprep.subr.mxu0 0.0
        %399 = vmatpush1.xpose.msra.mxu0 0.0
        %400 = vmatprep.subr.mxu0 0.0
        %401 = vmatpush1.xpose.msra.mxu0 0.0
        %402 = vmatprep.mubr.f32.mxu0 0.0
        %403 = vmatmul.mubr.f32.gmra.mrb[0].mxu0 %v324
        %v404 = vpop.f32.mrb[0].mxu0
        %v405 = vadd.f32 0.0, %v404
        %v406 = vpop.f32.mrb[0].mxu0
        %407 = vmatprep.mubr.f32.mxu0 0.0
        %408 = vmatmul.mubr.f32.gmra.mrb[0].mxu0 %v327
        %v409 = vpop.f32.mrb[0].mxu0
        %v410 = vadd.f32 0.0, %v409
        %v411 = vpop.f32.mrb[0].mxu0
        %412 = vmatprep.mubr.f32.mxu0 0.0
        %413 = vmatmul.mubr.f32.gmra.mrb[0].mxu0 %v330
        %v414 = vpop.f32.mrb[0].mxu0
        %v415 = vadd.f32 0.0, %v414
        %v416 = vpop.f32.mrb[0].mxu0
        %417 = vmatprep.mubr.f32.mxu0 0.0
        %418 = vmatmul.mubr.f32.gmra.mrb[0].mxu0 %v333
        %v419 = vpop.f32.mrb[0].mxu0
        %v420 = vadd.f32 0.0, %v419
        %v421 = vpop.f32.mrb[0].mxu0
        %422 = vdwg.mxu0
        %v423 = vmul.f32 %v244, %v244
        %v424 = vmul.f32 %v245, %v245
        %v425 = vmul.f32 %v246, %v246
        %v426 = vmul.f32 %v247, %v247
        %v427 = vsel %vm322, %v423, 0.0
        %428 = vadd.xlane.f32.xlu0 %v427
        %v429 = vpop.xlane.xlu0 %428
        %v430 = vsel %vm322, %v424, 0.0
        %431 = vadd.xlane.f32.xlu0 %v430
        %v432 = vpop.xlane.xlu0 %431
        %v433 = vsel %vm322, %v425, 0.0
        %434 = vadd.xlane.f32.xlu0 %v433
        %v435 = vpop.xlane.xlu0 %434
        %v436 = vsel %vm322, %v426, 0.0
        %437 = vadd.xlane.f32.xlu0 %v436
        %v438 = vpop.xlane.xlu0 %437
        %v439 = vmul.f32 %v319, %v319
        %vm440 = vcmask 257024
        %v441 = vsel %vm440, %v439, 0.0
        %442 = vadd.xlane.f32.xlu0 %v441
        %v443 = vpop.xlane.xlu0 %442
        %v444 = vmul.f32 %v405, 2.0
        %v445 = vmul.f32 %v410, 2.0
        %v446 = vmul.f32 %v415, 2.0
        %v447 = vmul.f32 %v420, 2.0
        %v448 = vsub.f32 %v444, %v429
        %v449 = vsub.f32 %v445, %v432
        %v450 = vsub.f32 %v446, %v435
        %v451 = vsub.f32 %v447, %v438
        %v453 = vlaneseq
        %v454 = vand.u32 %v453, 127
        %v455 = vlaneseq
        %v456 = vshrl.u32 %v455, 7
        %v457 = vsub.s32 %v454, %v456
        %v458 = vrot.slane %v443, %v457
        %vm459 = vcmask 1042434
        %v460 = vsel %vm459, %v458, %v458
        %vm461 = vcmask 1043459
        %v462 = vsel %vm461, %v458, %v460
        %vm463 = vcmask 1044484
        %v464 = vsel %vm463, %v458, %v462
        %vm465 = vcmask 1045509
        %v466 = vsel %vm465, %v458, %v464
        %vm467 = vcmask 1046534
        %v468 = vsel %vm467, %v458, %v466
        %vm469 = vcmask 1047559
        %v470 = vsel %vm469, %v458, %v468
        %v472 = vsub.f32 %v448, %v470
        %v473 = vsub.f32 %v449, %v470
        %v474 = vsub.f32 %v450, %v470
        %v475 = vsub.f32 %v451, %v470
        %vm476 = vcmask 31744
        %477 = vst.msk [vmem:[%s240] sm:$0xff] %vm476, %v472
        %478 = vst.msk [vmem:[%s240 + $0x8] sm:$0xff] %vm476, %v473
        %479 = vst.msk [vmem:[%s240 + $0x10] sm:$0xff] %vm476, %v474
        %480 = vst.msk [vmem:[%s240 + $0x18] sm:$0xff] %vm476, %v475
        %p481 = scmp.lt.s32.totalorder %s18, 1
        %s482 = scalar_select %p481, %s18, 1
        %s483 = smul.addr %s482, 4
        %s484 = smul.addr %s483, 8
        %s485 = scalar_lea.vmem %s3, %s484
        // Predicated region
        $region45: #{tpu_custom_call.1} parent=31 // pred_check
          %p486 = pneg %p109
        $region46: #{tpu_custom_call.1} parent=31 // pred_check_branch
          %488 = sbr.rel (%p486) target = $region48
        $region47: #{tpu_custom_call.1} parent=31 // pred_region
          _
        $region48: #{tpu_custom_call.1} parent=31 // pred_fallthru
          _
      $region32: #{tpu_custom_call.1} parent=5 // pred_fallthru
        _
      %p489 = scmp.le.s32.totalorder 2, %s13
      // Predicated region
      $region49: #{tpu_custom_call.1} parent=5 // pred_check
        %p490 = pneg %p489
      $region50: #{tpu_custom_call.1} parent=5 // pred_check_branch
        %492 = sbr.rel (%p490) target = $region52
      $region51: #{tpu_custom_call.1} parent=5 // pred_region
        %s493 = ssub.s32 %s13, 2
        // Predicated region
        $region53: #{tpu_custom_call.1} parent=51 // pred_check
          %p494 = pneg %p115
        $region54: #{tpu_custom_call.1} parent=51 // pred_check_branch
          %496 = sbr.rel (%p494) target = $region56
        $region55: #{tpu_custom_call.1} parent=51 // pred_region
          %p497 = scmp.lt.s32.totalorder %s19, 1
          %s498 = scalar_select %p497, %s19, 1
          %s499 = smul.addr %s498, 4
          %s500 = smul.addr %s499, 8
          %s501 = scalar_lea.vmem %s3, %s500
        $region56: #{tpu_custom_call.1} parent=51 // pred_fallthru
          _
      $region52: #{tpu_custom_call.1} parent=5 // pred_fallthru
        _
    $region6: #{tpu_custom_call.1} parent=1 // loop_footer
      %s17 = sadd.s32 1, %s13
    $region7: #{tpu_custom_call.1} parent=1 // loop_footer_branch
      %12 = sbr.rel target = $region3
    $region8: #{tpu_custom_call.1} parent=1 // loop_exit
      _
    %502 = vsyncpa [#allocation3], 1
    %s503 = scalar_lea.sflag [#allocation3], 1
    %504 = vsyncpa %s503, 1
    %505 = vsyncpa [#allocation5], 1
    %s506 = scalar_lea.sflag [#allocation5], 1
    %507 = vsyncpa %s506, 1

</llo_original>
